<compile_context>
chip_gen: v5e
topology: v5e:2x2
jax: 0.10.0
libtpu: 0.0.40
codegen_flags: <defaults>
</compile_context>

<pallas_src>
import functools

import jax
import jax.numpy as jnp
from jax.experimental import pallas as pl
from jax.experimental.pallas import tpu as pltpu


def _round_up(v, m):
    return ((v + m - 1) // m) * m


# ----------------------------------------------------------------------------
# Fused Pallas kernel: fc1 -> relu -> fc2 -> fc_final, all in VMEM
# ----------------------------------------------------------------------------
def _fused_embedding_model_kernel(x_ref, w1_ref, b1_ref, w2_ref, b2_ref,
                                  wf_ref, bf_ref, o_ref):
    # ---- EmbeddingDNN.fc1 + relu (dropout == identity) ----
    h = jnp.dot(x_ref[...], w1_ref[...], preferred_element_type=jnp.float32)
    h = jnp.maximum(h + b1_ref[...], 0.0)                          # (TM, 1024) f32

    # ---- EmbeddingDNN.fc2 (hidden padded to 128 lanes) ----
    e = jnp.dot(h.astype(w2_ref.dtype), w2_ref[...],
                preferred_element_type=jnp.float32) + b2_ref[...]  # (TM, Hp) f32

    # ---- fc_final (dropout == identity); lane-dense bf16 output slab ----
    y = jnp.dot(e.astype(wf_ref.dtype), wf_ref[...],
                preferred_element_type=jnp.float32) + bf_ref[...]  # (TM, Cp) f32
    o_ref[...] = y.astype(o_ref.dtype)


# ----------------------------------------------------------------------------
# One-time parameter preparation (hoisted out of the per-call path)
# ----------------------------------------------------------------------------
def prepare_params(params, *, num_classes):
    """Cast weights to bf16 and pad hidden->128, classes->128 once."""
    E, H1 = params["w1"].shape            # (embedding_dim, 1024)
    H = params["w2"].shape[1]             # hidden_dim
    Hp = max(128, _round_up(H, 128))
    Cp = max(128, _round_up(num_classes, 128))

    w1 = params["w1"].astype(jnp.bfloat16)                              # (E, 1024)
    b1 = params["b1"].reshape(1, H1).astype(jnp.float32)                # (1, 1024)

    w2 = jnp.zeros((H1, Hp), jnp.bfloat16).at[:, :H].set(
        params["w2"].astype(jnp.bfloat16))                              # (1024, Hp)
    b2 = jnp.zeros((1, Hp), jnp.float32).at[:, :H].set(
        params["b2"].reshape(1, H).astype(jnp.float32))                 # (1, Hp)

    wf = jnp.zeros((Hp, Cp), jnp.bfloat16).at[:H, :num_classes].set(
        params["wf"].astype(jnp.bfloat16))                              # (Hp, Cp)
    bf = jnp.zeros((1, Cp), jnp.float32).at[:, :num_classes].set(
        params["bf"].reshape(1, num_classes).astype(jnp.float32))       # (1, Cp)

    return {
        "w1": w1, "b1": b1, "w2": w2, "b2": b2, "wf": wf, "bf": bf,
        "E": E, "H1": H1, "Hp": Hp, "Cp": Cp, "num_classes": num_classes,
    }


# ----------------------------------------------------------------------------
# Forward: single fused pallas_call with a row-tiled, parallel grid
# ----------------------------------------------------------------------------
def embedding_model_forward(prep, smiles_embedding):
    """EmbeddingModelClass.forward as a single fused pallas_call."""
    x = smiles_embedding
    N, E = x.shape
    assert E == prep["E"], (E, prep["E"])
    H1, Hp, Cp = prep["H1"], prep["Hp"], prep["Cp"]
    num_classes = prep["num_classes"]

    # Row tiling: sublane-pad rows to a multiple of 8, tile at TM <= 256.
    n_pad8 = max(8, _round_up(N, 8))
    TM = min(256, n_pad8)
    Np = _round_up(n_pad8, TM)
    grid = (Np // TM,)

    # Per-call input prep: only x needs casting/padding (weights are hoisted).
    x_p = jnp.zeros((Np, E), jnp.bfloat16).at[:N].set(x.astype(jnp.bfloat16))

    flops = 2 * Np * (E * H1 + H1 * Hp + Hp * Cp)
    bytes_accessed = (
        x_p.size * 2
        + prep["w1"].size * 2 + prep["w2"].size * 2 + prep["wf"].size * 2
        + prep["b1"].size * 4 + prep["b2"].size * 4 + prep["bf"].size * 4
        + Np * Cp * 2)

    out_p = pl.pallas_call(
        _fused_embedding_model_kernel,
        out_shape=jax.ShapeDtypeStruct((Np, Cp), jnp.bfloat16),
        grid=grid,
        in_specs=[
            pl.BlockSpec((TM, E), lambda i: (i, 0)),     # x tile moves per step
            pl.BlockSpec((E, H1), lambda i: (0, 0)),     # weights stay resident
            pl.BlockSpec((1, H1), lambda i: (0, 0)),
            pl.BlockSpec((H1, Hp), lambda i: (0, 0)),
            pl.BlockSpec((1, Hp), lambda i: (0, 0)),
            pl.BlockSpec((Hp, Cp), lambda i: (0, 0)),
            pl.BlockSpec((1, Cp), lambda i: (0, 0)),
        ],
        out_specs=pl.BlockSpec((TM, Cp), lambda i: (i, 0)),
        compiler_params=pltpu.CompilerParams(
            dimension_semantics=("parallel",)),
        cost_estimate=pl.CostEstimate(
            flops=flops, transcendentals=0, bytes_accessed=bytes_accessed),
    )(x_p, prep["w1"], prep["b1"], prep["w2"], prep["b2"],
      prep["wf"], prep["bf"])

    # Slice the real (N, num_classes) logits out of the slab; upcast to f32.
    return out_p[:N, :num_classes].astype(jnp.float32)


# ----------------------------------------------------------------------------
# Parameter init (deterministic, synthetic)
# ----------------------------------------------------------------------------
def init_params(key, embedding_dim, hidden_dim=64, num_classes=3):
    def dense(k, shape):
        return 0.02 * jax.random.normal(k, shape, dtype=jnp.float32)

    ks = jax.random.split(key, 6)
    return {
        # EmbeddingDNN
        "w1": dense(ks[0], (embedding_dim, 1024)),
        "b1": dense(ks[1], (1024,)),
        "w2": dense(ks[2], (1024, hidden_dim)),
        "b2": dense(ks[3], (hidden_dim,)),
        # fc_final
        "wf": dense(ks[4], (hidden_dim, num_classes)),
        "bf": dense(ks[5], (num_classes,)),
    }


# ----------------------------------------------------------------------------
# Pure-JAX reference (fp32) for a sanity check
# ----------------------------------------------------------------------------
def reference_forward(params, x):
    h = jnp.maximum(x @ params["w1"] + params["b1"], 0.0)
    e = h @ params["w2"] + params["b2"]
    return e @ params["wf"] + params["bf"]


# ----------------------------------------------------------------------------
if __name__ == "__main__":
    key = jax.random.PRNGKey(0)
    k_param, k_x = jax.random.split(key, 2)

    embedding_dim = 32
    hidden_dim = 64
    num_classes = 3
    N = 2

    params = init_params(k_param, embedding_dim, hidden_dim, num_classes)
    prep = prepare_params(params, num_classes=num_classes)   # one-time prep
    smiles_embedding = jax.random.normal(k_x, (N, embedding_dim), jnp.float32)

    fwd = jax.jit(functools.partial(embedding_model_forward, prep))
    out = jax.block_until_ready(fwd(smiles_embedding))
    assert out.shape == (N, num_classes), out.shape

    ref = reference_forward(params, smiles_embedding)
    assert jnp.all(jnp.isfinite(out))
    # bf16 MXU feeds + bf16 output slab -> loose tolerance vs fp32 reference
    assert jnp.allclose(out, ref, rtol=5e-2, atol=5e-2), (out, ref)

    print("KERNEL_OK")
</pallas_src>

<mosaic_0001>
module attributes {stable_mosaic.version = 11 : i64} {
  func.func @_fused_embedding_model_kernel(%arg0: i32, %arg1: memref<8x32xbf16, #tpu.memory_space<vmem>>, %arg2: memref<32x1024xbf16, #tpu.memory_space<vmem>>, %arg3: memref<1x1024xf32, #tpu.memory_space<vmem>>, %arg4: memref<1024x128xbf16, #tpu.memory_space<vmem>>, %arg5: memref<1x128xf32, #tpu.memory_space<vmem>>, %arg6: memref<128x128xbf16, #tpu.memory_space<vmem>>, %arg7: memref<1x128xf32, #tpu.memory_space<vmem>>, %arg8: memref<8x128xbf16, #tpu.memory_space<vmem>>) attributes {dimension_semantics = [#tpu.dimension_semantics<parallel>], iteration_bounds = array<i64: 1>, scalar_prefetch = 0 : i64, scratch_operands = 0 : i64, tpu.core_type = #tpu.core_type<tc>, window_params = [{transform_indices = @transform_0, window_bounds = array<i64: 8, 32>}, {pipeline_mode = #tpu.pipeline_mode<synchronous>, transform_indices = @transform_1, window_bounds = array<i64: 32, 1024>}, {pipeline_mode = #tpu.pipeline_mode<synchronous>, transform_indices = @transform_2, window_bounds = array<i64: 1, 1024>}, {pipeline_mode = #tpu.pipeline_mode<synchronous>, transform_indices = @transform_3, window_bounds = array<i64: 1024, 128>}, {pipeline_mode = #tpu.pipeline_mode<synchronous>, transform_indices = @transform_4, window_bounds = array<i64: 1, 128>}, {pipeline_mode = #tpu.pipeline_mode<synchronous>, transform_indices = @transform_5, window_bounds = array<i64: 128, 128>}, {pipeline_mode = #tpu.pipeline_mode<synchronous>, transform_indices = @transform_6, window_bounds = array<i64: 1, 128>}, {transform_indices = @transform_7, window_bounds = array<i64: 8, 128>}]} {
    %c0 = arith.constant 0 : index
    %c0_0 = arith.constant 0 : index
    %0 = vector.load %arg1[%c0, %c0_0] : memref<8x32xbf16, #tpu.memory_space<vmem>>, vector<8x32xbf16>
    %c0_1 = arith.constant 0 : index
    %c0_2 = arith.constant 0 : index
    %1 = vector.load %arg2[%c0_1, %c0_2] : memref<32x1024xbf16, #tpu.memory_space<vmem>>, vector<32x1024xbf16>
    %cst = arith.constant dense<0.000000e+00> : vector<8x1024xf32>
    %2 = tpu.matmul %0, %1, %cst {dimension_numbers = #tpu.dot_dimension_numbers<[1], [0], [0], [1], [0, 0, 1, 1], [], []>} : vector<8x32xbf16>, vector<32x1024xbf16>, vector<8x1024xf32> -> vector<8x1024xf32>
    %c0_3 = arith.constant 0 : index
    %c0_4 = arith.constant 0 : index
    %3 = vector.load %arg3[%c0_3, %c0_4] : memref<1x1024xf32, #tpu.memory_space<vmem>>, vector<1x1024xf32>
    %4 = vector.broadcast %3 : vector<1x1024xf32> to vector<8x1024xf32>
    %5 = arith.addf %2, %4 : vector<8x1024xf32>
    %cst_5 = arith.constant 0.000000e+00 : f32
    %6 = vector.broadcast %cst_5 : f32 to vector<8x1024xf32>
    %7 = arith.maximumf %5, %6 : vector<8x1024xf32>
    %8 = arith.truncf %7 : vector<8x1024xf32> to vector<8x1024xbf16>
    %c0_6 = arith.constant 0 : index
    %c0_7 = arith.constant 0 : index
    %9 = vector.load %arg4[%c0_6, %c0_7] : memref<1024x128xbf16, #tpu.memory_space<vmem>>, vector<1024x128xbf16>
    %cst_8 = arith.constant dense<0.000000e+00> : vector<8x128xf32>
    %10 = tpu.matmul %8, %9, %cst_8 {dimension_numbers = #tpu.dot_dimension_numbers<[1], [0], [0], [1], [0, 0, 1, 1], [], []>} : vector<8x1024xbf16>, vector<1024x128xbf16>, vector<8x128xf32> -> vector<8x128xf32>
    %c0_9 = arith.constant 0 : index
    %c0_10 = arith.constant 0 : index
    %11 = vector.load %arg5[%c0_9, %c0_10] : memref<1x128xf32, #tpu.memory_space<vmem>>, vector<1x128xf32>
    %12 = vector.broadcast %11 : vector<1x128xf32> to vector<8x128xf32>
    %13 = arith.addf %10, %12 : vector<8x128xf32>
    %14 = arith.truncf %13 : vector<8x128xf32> to vector<8x128xbf16>
    %c0_11 = arith.constant 0 : index
    %c0_12 = arith.constant 0 : index
    %15 = vector.load %arg6[%c0_11, %c0_12] : memref<128x128xbf16, #tpu.memory_space<vmem>>, vector<128x128xbf16>
    %cst_13 = arith.constant dense<0.000000e+00> : vector<8x128xf32>
    %16 = tpu.matmul %14, %15, %cst_13 {dimension_numbers = #tpu.dot_dimension_numbers<[1], [0], [0], [1], [0, 0, 1, 1], [], []>} : vector<8x128xbf16>, vector<128x128xbf16>, vector<8x128xf32> -> vector<8x128xf32>
    %c0_14 = arith.constant 0 : index
    %c0_15 = arith.constant 0 : index
    %17 = vector.load %arg7[%c0_14, %c0_15] : memref<1x128xf32, #tpu.memory_space<vmem>>, vector<1x128xf32>
    %18 = vector.broadcast %17 : vector<1x128xf32> to vector<8x128xf32>
    %19 = arith.addf %16, %18 : vector<8x128xf32>
    %20 = arith.truncf %19 : vector<8x128xf32> to vector<8x128xbf16>
    %c0_16 = arith.constant 0 : index
    %c0_17 = arith.constant 0 : index
    %21 = vector.load %arg8[%c0_16, %c0_17] : memref<8x128xbf16, #tpu.memory_space<vmem>>, vector<8x128xbf16>
    tpu.vector_store %arg8[%c0_16, %c0_17], %20 {strides = array<i32>} : memref<8x128xbf16, #tpu.memory_space<vmem>>, vector<8x128xbf16>,
    return
  }
  func.func @transform_0(%arg0: i32) -> (i32, i32) {
    %c0_i32 = arith.constant 0 : i32
    %c0_i32_0 = arith.constant 0 : i32
    return %arg0, %c0_i32 : i32, i32
  }
  func.func @transform_1(%arg0: i32) -> (i32, i32) {
    %c0_i32 = arith.constant 0 : i32
    %c0_i32_0 = arith.constant 0 : i32
    %c0_i32_1 = arith.constant 0 : i32
    return %c0_i32, %c0_i32_0 : i32, i32
  }
  func.func @transform_2(%arg0: i32) -> (i32, i32) {
    %c0_i32 = arith.constant 0 : i32
    %c0_i32_0 = arith.constant 0 : i32
    %c0_i32_1 = arith.constant 0 : i32
    return %c0_i32, %c0_i32_0 : i32, i32
  }
  func.func @transform_3(%arg0: i32) -> (i32, i32) {
    %c0_i32 = arith.constant 0 : i32
    %c0_i32_0 = arith.constant 0 : i32
    %c0_i32_1 = arith.constant 0 : i32
    return %c0_i32, %c0_i32_0 : i32, i32
  }
  func.func @transform_4(%arg0: i32) -> (i32, i32) {
    %c0_i32 = arith.constant 0 : i32
    %c0_i32_0 = arith.constant 0 : i32
    %c0_i32_1 = arith.constant 0 : i32
    return %c0_i32, %c0_i32_0 : i32, i32
  }
  func.func @transform_5(%arg0: i32) -> (i32, i32) {
    %c0_i32 = arith.constant 0 : i32
    %c0_i32_0 = arith.constant 0 : i32
    %c0_i32_1 = arith.constant 0 : i32
    return %c0_i32, %c0_i32_0 : i32, i32
  }
  func.func @transform_6(%arg0: i32) -> (i32, i32) {
    %c0_i32 = arith.constant 0 : i32
    %c0_i32_0 = arith.constant 0 : i32
    %c0_i32_1 = arith.constant 0 : i32
    return %c0_i32, %c0_i32_0 : i32, i32
  }
  func.func @transform_7(%arg0: i32) -> (i32, i32) {
    %c0_i32 = arith.constant 0 : i32
    %c0_i32_0 = arith.constant 0 : i32
    return %arg0, %c0_i32 : i32, i32
  }
}

</mosaic_0001>

<llo_original>
// kernel: embedding_model_forward.1
$region0: #{embedding_model_forward.1}
  #allocation0 [shape = 'u32[]', space=smem, size = 0x4, offset = 0x4, fixed_abs, tag = 'smem constant byte address 0x4 - core index']
  #allocation1 [shape = 'u32[72,128]{1,0:T(1,128)}', space=vmem, size = 0x9000, scoped, tag = 'internal scratch']
  %s0 = inlined_call_operand.vmem [shape: bf16[8,32], index: 0, kind: input, shape index: {}]
  %s1 = inlined_call_operand.hbm [shape: bf16[32,1024], index: 1, kind: input, shape index: {}]
  %s2 = inlined_call_operand.vmem [shape: f32[1,1024], index: 2, kind: input, shape index: {}]
  %s3 = inlined_call_operand.hbm [shape: bf16[1024,128], index: 3, kind: input, shape index: {}]
  %s4 = inlined_call_operand.vmem [shape: f32[1,128], index: 4, kind: input, shape index: {}]
  %s5 = inlined_call_operand.hbm [shape: bf16[128,128], index: 5, kind: input, shape index: {}]
  %s6 = inlined_call_operand.vmem [shape: f32[1,128], index: 6, kind: input, shape index: {}]
  %s7 = inlined_call_operand.vmem [shape: bf16[8,128], index: 7, kind: output, shape index: {}]
  %s8 = sld [smem:[#allocation0]]
  $region50: #{embedding_model_forward.1} parent=0
    _
  %s10 = ssub.s32 1, %s8
  %s11 = scalar_select 0, %s10, %s8
  $region1: #{embedding_model_forward.1} parent=0
    #allocation2 [shape = 'u8[65536]{0}', space=vmem, size = 0x10000, scoped, tag = 'input window, operand 1, single buffered']
    #allocation3 [shape = 's32[1]{0}', space=sflag, size = 0x4, scoped, tag = 'scoped memory for embedding_model_forward.1']
    #allocation4 [shape = 'u8[262144]{0}', space=vmem, size = 0x40000, scoped, tag = 'input window, operand 3, single buffered']
    #allocation5 [shape = 's32[1]{0}', space=sflag, size = 0x4, scoped, tag = 'scoped memory for embedding_model_forward.1']
    #allocation6 [shape = 'u8[32768]{0}', space=vmem, size = 0x8000, scoped, tag = 'input window, operand 5, single buffered']
    %12 = vsyncpa [#allocation3], 0
    %13 = vsyncpa [#allocation5], 0
    // Predicated region
    $region2: #{embedding_model_forward.1} parent=1 // pred_check
      _
    $region3: #{embedding_model_forward.1} parent=1 // pred_check_branch
      %15 = sbr.rel (0) target = $region5
    $region4: #{embedding_model_forward.1} parent=1 // pred_region
      _
    $region5: #{embedding_model_forward.1} parent=1 // pred_fallthru
      _
    // Predicated region
    $region6: #{embedding_model_forward.1} parent=1 // pred_check
      _
    $region7: #{embedding_model_forward.1} parent=1 // pred_check_branch
      %17 = sbr.rel (0) target = $region9
    $region8: #{embedding_model_forward.1} parent=1 // pred_region
      %19 = vsyncadd [#allocation3], 0
      %s20 = sshll.u32 %s1, 4
      %s21 = int_to_ptr.hbm [resolvable:$true] %s20
      %s22 = sshll.u32 [#allocation2], 4
      %s23 = int_to_ptr.vmem [resolvable:$true] %s22
      %28 = dma.hbm_to_vmem [thread:$0]  %s21, 2048, %s23, [#allocation3], 512, 512, 32
    $region9: #{embedding_model_forward.1} parent=1 // pred_fallthru
      _
    // Predicated region
    $region10: #{embedding_model_forward.1} parent=1 // pred_check
      _
    $region11: #{embedding_model_forward.1} parent=1 // pred_check_branch
      %30 = sbr.rel (0) target = $region13
    $region12: #{embedding_model_forward.1} parent=1 // pred_region
      _
    $region13: #{embedding_model_forward.1} parent=1 // pred_fallthru
      _
    // Predicated region
    $region14: #{embedding_model_forward.1} parent=1 // pred_check
      _
    $region15: #{embedding_model_forward.1} parent=1 // pred_check_branch
      %32 = sbr.rel (0) target = $region17
    $region16: #{embedding_model_forward.1} parent=1 // pred_region
      %34 = vsyncadd [#allocation5], 0
      %s35 = sshll.u32 %s3, 4
      %s36 = int_to_ptr.hbm [resolvable:$true] %s35
      %s37 = sshll.u32 [#allocation4], 4
      %s38 = int_to_ptr.vmem [resolvable:$true] %s37
      %43 = dma.hbm_to_vmem [thread:$0]  %s36, 8192, %s38, [#allocation5], 64, 64, 4
    $region17: #{embedding_model_forward.1} parent=1 // pred_fallthru
      _
    // Predicated region
    $region18: #{embedding_model_forward.1} parent=1 // pred_check
      _
    $region19: #{embedding_model_forward.1} parent=1 // pred_check_branch
      %45 = sbr.rel (0) target = $region21
    $region20: #{embedding_model_forward.1} parent=1 // pred_region
      _
    $region21: #{embedding_model_forward.1} parent=1 // pred_fallthru
      _
    // Predicated region
    $region22: #{embedding_model_forward.1} parent=1 // pred_check
      _
    $region23: #{embedding_model_forward.1} parent=1 // pred_check_branch
      %47 = sbr.rel (0) target = $region25
    $region24: #{embedding_model_forward.1} parent=1 // pred_region
      %49 = vsyncadd [#allocation5], 0
      %s50 = sshll.u32 %s5, 4
      %s51 = int_to_ptr.hbm [resolvable:$true] %s50
      %s52 = sshll.u32 [#allocation6], 4
      %s53 = int_to_ptr.vmem [resolvable:$true] %s52
      %58 = dma.hbm_to_vmem [thread:$0]  %s51, 1024, %s53, [#allocation5], 64, 64, 4
    $region25: #{embedding_model_forward.1} parent=1 // pred_fallthru
      _
    // Predicated region
    $region26: #{embedding_model_forward.1} parent=1 // pred_check
      _
    $region27: #{embedding_model_forward.1} parent=1 // pred_check_branch
      %60 = sbr.rel (0) target = $region29
    $region28: #{embedding_model_forward.1} parent=1 // pred_region
      _
    $region29: #{embedding_model_forward.1} parent=1 // pred_fallthru
      _
    // Predicated region
    $region30: #{embedding_model_forward.1} parent=1 // pred_check
      _
    $region31: #{embedding_model_forward.1} parent=1 // pred_check_branch
      %62 = sbr.rel (0) target = $region33
    $region32: #{embedding_model_forward.1} parent=1 // pred_region
      %64 = dma.done [#allocation3], 2048
    $region33: #{embedding_model_forward.1} parent=1 // pred_fallthru
      _
    // Predicated region
    $region34: #{embedding_model_forward.1} parent=1 // pred_check
      _
    $region35: #{embedding_model_forward.1} parent=1 // pred_check_branch
      %66 = sbr.rel (0) target = $region37
    $region36: #{embedding_model_forward.1} parent=1 // pred_region
      %68 = dma.done [#allocation5], 8192
    $region37: #{embedding_model_forward.1} parent=1 // pred_fallthru
      _
    // Predicated region
    $region38: #{embedding_model_forward.1} parent=1 // pred_check
      _
    $region39: #{embedding_model_forward.1} parent=1 // pred_check_branch
      %70 = sbr.rel (0) target = $region41
    $region40: #{embedding_model_forward.1} parent=1 // pred_region
      %72 = dma.done [#allocation5], 1024
    $region41: #{embedding_model_forward.1} parent=1 // pred_fallthru
      _
    %v74 = vld [vmem:[%s0] sm:$0xf]
    %v75 = vld [vmem:[#allocation2] sm:$0xff]
    %v76 = vld [vmem:[#allocation2 + $0x8] sm:$0xff]
    %v77 = vld [vmem:[#allocation2 + $0x10] sm:$0xff]
    %v78 = vld [vmem:[#allocation2 + $0x18] sm:$0xff]
    %v79 = vld [vmem:[#allocation2 + $0x20] sm:$0xff]
    %v80 = vld [vmem:[#allocation2 + $0x28] sm:$0xff]
    %v81 = vld [vmem:[#allocation2 + $0x30] sm:$0xff]
    %v82 = vld [vmem:[#allocation2 + $0x38] sm:$0xff]
    %v83 = vld [vmem:[#allocation2 + $0x40] sm:$0xff]
    %v84 = vld [vmem:[#allocation2 + $0x48] sm:$0xff]
    %v85 = vld [vmem:[#allocation2 + $0x50] sm:$0xff]
    %v86 = vld [vmem:[#allocation2 + $0x58] sm:$0xff]
    %v87 = vld [vmem:[#allocation2 + $0x60] sm:$0xff]
    %v88 = vld [vmem:[#allocation2 + $0x68] sm:$0xff]
    %v89 = vld [vmem:[#allocation2 + $0x70] sm:$0xff]
    %v90 = vld [vmem:[#allocation2 + $0x78] sm:$0xff]
    %v91 = vld [vmem:[%s2] sm:$0xff]
    %v93 = vperm.slane %v91, 0
    %v94 = vperm.slane %v91, 1
    %v95 = vperm.slane %v91, 2
    %v96 = vperm.slane %v91, 3
    %v97 = vperm.slane %v91, 4
    %v98 = vperm.slane %v91, 5
    %v99 = vperm.slane %v91, 6
    %v100 = vperm.slane %v91, 7
    %v125 = vunpack.c.l.b16 %v75
    %v126 = vunpack.c.h.b16 %v75
    %v127 = vunpack.c.l.b16 %v76
    %v128 = vunpack.c.h.b16 %v76
    %v129 = vunpack.c.l.b16 %v77
    %v130 = vunpack.c.h.b16 %v77
    %v131 = vunpack.c.l.b16 %v78
    %v132 = vunpack.c.h.b16 %v78
    %v133 = vunpack.c.l.b16 %v79
    %v134 = vunpack.c.h.b16 %v79
    %v135 = vunpack.c.l.b16 %v80
    %v136 = vunpack.c.h.b16 %v80
    %v137 = vunpack.c.l.b16 %v81
    %v138 = vunpack.c.h.b16 %v81
    %v139 = vunpack.c.l.b16 %v82
    %v140 = vunpack.c.h.b16 %v82
    %v141 = vunpack.c.l.b16 %v83
    %v142 = vunpack.c.h.b16 %v83
    %v143 = vunpack.c.l.b16 %v84
    %v144 = vunpack.c.h.b16 %v84
    %v145 = vunpack.c.l.b16 %v85
    %v146 = vunpack.c.h.b16 %v85
    %v147 = vunpack.c.l.b16 %v86
    %v148 = vunpack.c.h.b16 %v86
    %v149 = vunpack.c.l.b16 %v87
    %v150 = vunpack.c.h.b16 %v87
    %v151 = vunpack.c.l.b16 %v88
    %v152 = vunpack.c.h.b16 %v88
    %v153 = vunpack.c.l.b16 %v89
    %v154 = vunpack.c.h.b16 %v89
    %v155 = vunpack.c.l.b16 %v90
    %v156 = vunpack.c.h.b16 %v90
    %v157 = vpack.c.b16 %v133, %v125
    %v158 = vpack.c.b16 %v134, %v126
    %v159 = vpack.c.b16 %v135, %v127
    %v160 = vpack.c.b16 %v136, %v128
    %v161 = vpack.c.b16 %v137, %v129
    %v162 = vpack.c.b16 %v138, %v130
    %v163 = vpack.c.b16 %v139, %v131
    %v164 = vpack.c.b16 %v140, %v132
    %v165 = vpack.c.b16 %v149, %v141
    %v166 = vpack.c.b16 %v150, %v142
    %v167 = vpack.c.b16 %v151, %v143
    %v168 = vpack.c.b16 %v152, %v144
    %v169 = vpack.c.b16 %v153, %v145
    %v170 = vpack.c.b16 %v154, %v146
    %v171 = vpack.c.b16 %v155, %v147
    %v172 = vpack.c.b16 %v156, %v148
    %vm189 = vcmask 261120
    %v191 = vsel %vm189, %v74, 0
    %193 = vmatpush.bf16.msra.mxu0 0
    %194 = vmatpush.bf16.msra.mxu0 0
    %195 = vmatpush.bf16.msra.mxu0 0
    %196 = vmatpush.bf16.msra.mxu0 0
    %197 = vmatpush.bf16.msra.mxu0 0
    %198 = vmatpush.bf16.msra.mxu0 0
    %199 = vmatpush.bf16.msra.mxu0 %v165
    %200 = vmatpush.bf16.msra.mxu0 %v157
    %201 = vmatmul.bf16.gmra.mxu0 %v191
    %v202 = vpop.f32.mrf.mxu0
    %v203 = vadd.f32 %v93, %v202
    %v204 = vpop.f32.mrf.mxu0
    %205 = vdwg.mxu0
    %206 = vmatpush.bf16.msra.mxu0 0
    %207 = vmatpush.bf16.msra.mxu0 0
    %208 = vmatpush.bf16.msra.mxu0 0
    %209 = vmatpush.bf16.msra.mxu0 0
    %210 = vmatpush.bf16.msra.mxu0 0
    %211 = vmatpush.bf16.msra.mxu0 0
    %212 = vmatpush.bf16.msra.mxu0 %v166
    %213 = vmatpush.bf16.msra.mxu0 %v158
    %214 = vmatmul.bf16.gmra.mxu0 %v191
    %v215 = vpop.f32.mrf.mxu0
    %v216 = vadd.f32 %v94, %v215
    %v217 = vpop.f32.mrf.mxu0
    %218 = vdwg.mxu0
    %219 = vmatpush.bf16.msra.mxu0 0
    %220 = vmatpush.bf16.msra.mxu0 0
    %221 = vmatpush.bf16.msra.mxu0 0
    %222 = vmatpush.bf16.msra.mxu0 0
    %223 = vmatpush.bf16.msra.mxu0 0
    %224 = vmatpush.bf16.msra.mxu0 0
    %225 = vmatpush.bf16.msra.mxu0 %v167
    %226 = vmatpush.bf16.msra.mxu0 %v159
    %227 = vmatmul.bf16.gmra.mxu0 %v191
    %v228 = vpop.f32.mrf.mxu0
    %v229 = vadd.f32 %v95, %v228
    %v230 = vpop.f32.mrf.mxu0
    %231 = vdwg.mxu0
    %232 = vmatpush.bf16.msra.mxu0 0
    %233 = vmatpush.bf16.msra.mxu0 0
    %234 = vmatpush.bf16.msra.mxu0 0
    %235 = vmatpush.bf16.msra.mxu0 0
    %236 = vmatpush.bf16.msra.mxu0 0
    %237 = vmatpush.bf16.msra.mxu0 0
    %238 = vmatpush.bf16.msra.mxu0 %v168
    %239 = vmatpush.bf16.msra.mxu0 %v160
    %240 = vmatmul.bf16.gmra.mxu0 %v191
    %v241 = vpop.f32.mrf.mxu0
    %v242 = vadd.f32 %v96, %v241
    %v243 = vpop.f32.mrf.mxu0
    %244 = vdwg.mxu0
    %245 = vmatpush.bf16.msra.mxu0 0
    %246 = vmatpush.bf16.msra.mxu0 0
    %247 = vmatpush.bf16.msra.mxu0 0
    %248 = vmatpush.bf16.msra.mxu0 0
    %249 = vmatpush.bf16.msra.mxu0 0
    %250 = vmatpush.bf16.msra.mxu0 0
    %251 = vmatpush.bf16.msra.mxu0 %v169
    %252 = vmatpush.bf16.msra.mxu0 %v161
    %253 = vmatmul.bf16.gmra.mxu0 %v191
    %v254 = vpop.f32.mrf.mxu0
    %v255 = vadd.f32 %v97, %v254
    %v256 = vpop.f32.mrf.mxu0
    %257 = vdwg.mxu0
    %258 = vmatpush.bf16.msra.mxu0 0
    %259 = vmatpush.bf16.msra.mxu0 0
    %260 = vmatpush.bf16.msra.mxu0 0
    %261 = vmatpush.bf16.msra.mxu0 0
    %262 = vmatpush.bf16.msra.mxu0 0
    %263 = vmatpush.bf16.msra.mxu0 0
    %264 = vmatpush.bf16.msra.mxu0 %v170
    %265 = vmatpush.bf16.msra.mxu0 %v162
    %266 = vmatmul.bf16.gmra.mxu0 %v191
    %v267 = vpop.f32.mrf.mxu0
    %v268 = vadd.f32 %v98, %v267
    %v269 = vpop.f32.mrf.mxu0
    %270 = vdwg.mxu0
    %271 = vmatpush.bf16.msra.mxu0 0
    %272 = vmatpush.bf16.msra.mxu0 0
    %273 = vmatpush.bf16.msra.mxu0 0
    %274 = vmatpush.bf16.msra.mxu0 0
    %275 = vmatpush.bf16.msra.mxu0 0
    %276 = vmatpush.bf16.msra.mxu0 0
    %277 = vmatpush.bf16.msra.mxu0 %v171
    %278 = vmatpush.bf16.msra.mxu0 %v163
    %279 = vmatmul.bf16.gmra.mxu0 %v191
    %v280 = vpop.f32.mrf.mxu0
    %v281 = vadd.f32 %v99, %v280
    %v282 = vpop.f32.mrf.mxu0
    %283 = vdwg.mxu0
    %284 = vmatpush.bf16.msra.mxu0 0
    %285 = vmatpush.bf16.msra.mxu0 0
    %286 = vmatpush.bf16.msra.mxu0 0
    %287 = vmatpush.bf16.msra.mxu0 0
    %288 = vmatpush.bf16.msra.mxu0 0
    %289 = vmatpush.bf16.msra.mxu0 0
    %290 = vmatpush.bf16.msra.mxu0 %v172
    %291 = vmatpush.bf16.msra.mxu0 %v164
    %292 = vmatmul.bf16.gmra.mxu0 %v191
    %v293 = vpop.f32.mrf.mxu0
    %v294 = vadd.f32 %v100, %v293
    %v295 = vpop.f32.mrf.mxu0
    %296 = vdwg.mxu0
    %v297 = vmax.f32 %v203, 0.0
    %v298 = vmax.f32 %v216, 0.0
    %v299 = vmax.f32 %v229, 0.0
    %v300 = vmax.f32 %v242, 0.0
    %v301 = vmax.f32 %v255, 0.0
    %v302 = vmax.f32 %v268, 0.0
    %v303 = vmax.f32 %v281, 0.0
    %v304 = vmax.f32 %v294, 0.0
    %v305 = vpack.c.bf16 %v297, %v297
    %v306 = vpack.c.bf16 %v298, %v298
    %v307 = vpack.c.bf16 %v299, %v299
    %v308 = vpack.c.bf16 %v300, %v300
    %v309 = vpack.c.bf16 %v301, %v301
    %v310 = vpack.c.bf16 %v302, %v302
    %v311 = vpack.c.bf16 %v303, %v303
    %v312 = vpack.c.bf16 %v304, %v304
    %v313 = vld [vmem:[#allocation4] sm:$0xf]
    %v314 = vld [vmem:[#allocation4 + $0x4] sm:$0xf]
    %v315 = vld [vmem:[#allocation4 + $0x8] sm:$0xf]
    %v316 = vld [vmem:[#allocation4 + $0xc] sm:$0xf]
    %v317 = vld [vmem:[#allocation4 + $0x10] sm:$0xf]
    %v318 = vld [vmem:[#allocation4 + $0x14] sm:$0xf]
    %v319 = vld [vmem:[#allocation4 + $0x18] sm:$0xf]
    %v320 = vld [vmem:[#allocation4 + $0x1c] sm:$0xf]
    %v321 = vld [vmem:[#allocation4 + $0x20] sm:$0xf]
    %v322 = vld [vmem:[#allocation4 + $0x24] sm:$0xf]
    %v323 = vld [vmem:[#allocation4 + $0x28] sm:$0xf]
    %v324 = vld [vmem:[#allocation4 + $0x2c] sm:$0xf]
    %v325 = vld [vmem:[#allocation4 + $0x30] sm:$0xf]
    %v326 = vld [vmem:[#allocation4 + $0x34] sm:$0xf]
    %v327 = vld [vmem:[#allocation4 + $0x38] sm:$0xf]
    %v328 = vld [vmem:[#allocation4 + $0x3c] sm:$0xf]
    %v329 = vld [vmem:[#allocation4 + $0x40] sm:$0xf]
    %v330 = vld [vmem:[#allocation4 + $0x44] sm:$0xf]
    %v331 = vld [vmem:[#allocation4 + $0x48] sm:$0xf]
    %v332 = vld [vmem:[#allocation4 + $0x4c] sm:$0xf]
    %v333 = vld [vmem:[#allocation4 + $0x50] sm:$0xf]
    %v334 = vld [vmem:[#allocation4 + $0x54] sm:$0xf]
    %v335 = vld [vmem:[#allocation4 + $0x58] sm:$0xf]
    %v336 = vld [vmem:[#allocation4 + $0x5c] sm:$0xf]
    %v337 = vld [vmem:[#allocation4 + $0x60] sm:$0xf]
    %v338 = vld [vmem:[#allocation4 + $0x64] sm:$0xf]
    %v339 = vld [vmem:[#allocation4 + $0x68] sm:$0xf]
    %v340 = vld [vmem:[#allocation4 + $0x6c] sm:$0xf]
    %v341 = vld [vmem:[#allocation4 + $0x70] sm:$0xf]
    %v342 = vld [vmem:[#allocation4 + $0x74] sm:$0xf]
    %v343 = vld [vmem:[#allocation4 + $0x78] sm:$0xf]
    %v344 = vld [vmem:[#allocation4 + $0x7c] sm:$0xf]
    %v345 = vld [vmem:[#allocation4 + $0x80] sm:$0xf]
    %v346 = vld [vmem:[#allocation4 + $0x84] sm:$0xf]
    %v347 = vld [vmem:[#allocation4 + $0x88] sm:$0xf]
    %v348 = vld [vmem:[#allocation4 + $0x8c] sm:$0xf]
    %v349 = vld [vmem:[#allocation4 + $0x90] sm:$0xf]
    %v350 = vld [vmem:[#allocation4 + $0x94] sm:$0xf]
    %v351 = vld [vmem:[#allocation4 + $0x98] sm:$0xf]
    %v352 = vld [vmem:[#allocation4 + $0x9c] sm:$0xf]
    %v353 = vld [vmem:[#allocation4 + $0xa0] sm:$0xf]
    %v354 = vld [vmem:[#allocation4 + $0xa4] sm:$0xf]
    %v355 = vld [vmem:[#allocation4 + $0xa8] sm:$0xf]
    %v356 = vld [vmem:[#allocation4 + $0xac] sm:$0xf]
    %v357 = vld [vmem:[#allocation4 + $0xb0] sm:$0xf]
    %v358 = vld [vmem:[#allocation4 + $0xb4] sm:$0xf]
    %v359 = vld [vmem:[#allocation4 + $0xb8] sm:$0xf]
    %v360 = vld [vmem:[#allocation4 + $0xbc] sm:$0xf]
    %v361 = vld [vmem:[#allocation4 + $0xc0] sm:$0xf]
    %v362 = vld [vmem:[#allocation4 + $0xc4] sm:$0xf]
    %v363 = vld [vmem:[#allocation4 + $0xc8] sm:$0xf]
    %v364 = vld [vmem:[#allocation4 + $0xcc] sm:$0xf]
    %v365 = vld [vmem:[#allocation4 + $0xd0] sm:$0xf]
    %v366 = vld [vmem:[#allocation4 + $0xd4] sm:$0xf]
    %v367 = vld [vmem:[#allocation4 + $0xd8] sm:$0xf]
    %v368 = vld [vmem:[#allocation4 + $0xdc] sm:$0xf]
    %v369 = vld [vmem:[#allocation4 + $0xe0] sm:$0xf]
    %v370 = vld [vmem:[#allocation4 + $0xe4] sm:$0xf]
    %v371 = vld [vmem:[#allocation4 + $0xe8] sm:$0xf]
    %v372 = vld [vmem:[#allocation4 + $0xec] sm:$0xf]
    %v373 = vld [vmem:[#allocation4 + $0xf0] sm:$0xf]
    %v374 = vld [vmem:[#allocation4 + $0xf4] sm:$0xf]
    %v375 = vld [vmem:[#allocation4 + $0xf8] sm:$0xf]
    %v376 = vld [vmem:[#allocation4 + $0xfc] sm:$0xf]
    %v377 = vld [vmem:[#allocation4 + $0x100] sm:$0xf]
    %v378 = vld [vmem:[#allocation4 + $0x104] sm:$0xf]
    %v379 = vld [vmem:[#allocation4 + $0x108] sm:$0xf]
    %v380 = vld [vmem:[#allocation4 + $0x10c] sm:$0xf]
    %v381 = vld [vmem:[#allocation4 + $0x110] sm:$0xf]
    %v382 = vld [vmem:[#allocation4 + $0x114] sm:$0xf]
    %v383 = vld [vmem:[#allocation4 + $0x118] sm:$0xf]
    %v384 = vld [vmem:[#allocation4 + $0x11c] sm:$0xf]
    %v385 = vld [vmem:[#allocation4 + $0x120] sm:$0xf]
    %v386 = vld [vmem:[#allocation4 + $0x124] sm:$0xf]
    %v387 = vld [vmem:[#allocation4 + $0x128] sm:$0xf]
    %v388 = vld [vmem:[#allocation4 + $0x12c] sm:$0xf]
    %v389 = vld [vmem:[#allocation4 + $0x130] sm:$0xf]
    %v390 = vld [vmem:[#allocation4 + $0x134] sm:$0xf]
    %v391 = vld [vmem:[#allocation4 + $0x138] sm:$0xf]
    %v392 = vld [vmem:[#allocation4 + $0x13c] sm:$0xf]
    %v393 = vld [vmem:[#allocation4 + $0x140] sm:$0xf]
    %v394 = vld [vmem:[#allocation4 + $0x144] sm:$0xf]
    %v395 = vld [vmem:[#allocation4 + $0x148] sm:$0xf]
    %v396 = vld [vmem:[#allocation4 + $0x14c] sm:$0xf]
    %v397 = vld [vmem:[#allocation4 + $0x150] sm:$0xf]
    %v398 = vld [vmem:[#allocation4 + $0x154] sm:$0xf]
    %v399 = vld [vmem:[#allocation4 + $0x158] sm:$0xf]
    %v400 = vld [vmem:[#allocation4 + $0x15c] sm:$0xf]
    %v401 = vld [vmem:[#allocation4 + $0x160] sm:$0xf]
    %v402 = vld [vmem:[#allocation4 + $0x164] sm:$0xf]
    %v403 = vld [vmem:[#allocation4 + $0x168] sm:$0xf]
    %v404 = vld [vmem:[#allocation4 + $0x16c] sm:$0xf]
    %v405 = vld [vmem:[#allocation4 + $0x170] sm:$0xf]
    %v406 = vld [vmem:[#allocation4 + $0x174] sm:$0xf]
    %v407 = vld [vmem:[#allocation4 + $0x178] sm:$0xf]
    %v408 = vld [vmem:[#allocation4 + $0x17c] sm:$0xf]
    %v409 = vld [vmem:[#allocation4 + $0x180] sm:$0xf]
    %v410 = vld [vmem:[#allocation4 + $0x184] sm:$0xf]
    %v411 = vld [vmem:[#allocation4 + $0x188] sm:$0xf]
    %v412 = vld [vmem:[#allocation4 + $0x18c] sm:$0xf]
    %v413 = vld [vmem:[#allocation4 + $0x190] sm:$0xf]
    %v414 = vld [vmem:[#allocation4 + $0x194] sm:$0xf]
    %v415 = vld [vmem:[#allocation4 + $0x198] sm:$0xf]
    %v416 = vld [vmem:[#allocation4 + $0x19c] sm:$0xf]
    %v417 = vld [vmem:[#allocation4 + $0x1a0] sm:$0xf]
    %v418 = vld [vmem:[#allocation4 + $0x1a4] sm:$0xf]
    %v419 = vld [vmem:[#allocation4 + $0x1a8] sm:$0xf]
    %v420 = vld [vmem:[#allocation4 + $0x1ac] sm:$0xf]
    %v421 = vld [vmem:[#allocation4 + $0x1b0] sm:$0xf]
    %v422 = vld [vmem:[#allocation4 + $0x1b4] sm:$0xf]
    %v423 = vld [vmem:[#allocation4 + $0x1b8] sm:$0xf]
    %v424 = vld [vmem:[#allocation4 + $0x1bc] sm:$0xf]
    %v425 = vld [vmem:[#allocation4 + $0x1c0] sm:$0xf]
    %v426 = vld [vmem:[#allocation4 + $0x1c4] sm:$0xf]
    %v427 = vld [vmem:[#allocation4 + $0x1c8] sm:$0xf]
    %v428 = vld [vmem:[#allocation4 + $0x1cc] sm:$0xf]
    %v429 = vld [vmem:[#allocation4 + $0x1d0] sm:$0xf]
    %v430 = vld [vmem:[#allocation4 + $0x1d4] sm:$0xf]
    %v431 = vld [vmem:[#allocation4 + $0x1d8] sm:$0xf]
    %v432 = vld [vmem:[#allocation4 + $0x1dc] sm:$0xf]
    %v433 = vld [vmem:[#allocation4 + $0x1e0] sm:$0xf]
    %v434 = vld [vmem:[#allocation4 + $0x1e4] sm:$0xf]
    %v435 = vld [vmem:[#allocation4 + $0x1e8] sm:$0xf]
    %v436 = vld [vmem:[#allocation4 + $0x1ec] sm:$0xf]
    %v437 = vld [vmem:[#allocation4 + $0x1f0] sm:$0xf]
    %v438 = vld [vmem:[#allocation4 + $0x1f4] sm:$0xf]
    %v439 = vld [vmem:[#allocation4 + $0x1f8] sm:$0xf]
    %v440 = vld [vmem:[#allocation4 + $0x1fc] sm:$0xf]
    %v441 = vld [vmem:[%s4] sm:$0x1]
    %v443 = vperm.slane %v441, 0
    %v573 = vunpack.c.l.b16 %v313
    %v574 = vunpack.c.l.b16 %v314
    %v575 = vunpack.c.l.b16 %v315
    %v576 = vunpack.c.l.b16 %v316
    %v577 = vunpack.c.l.b16 %v317
    %v578 = vunpack.c.l.b16 %v318
    %v579 = vunpack.c.l.b16 %v319
    %v580 = vunpack.c.l.b16 %v320
    %v581 = vunpack.c.l.b16 %v321
    %v582 = vunpack.c.l.b16 %v322
    %v583 = vunpack.c.l.b16 %v323
    %v584 = vunpack.c.l.b16 %v324
    %v585 = vunpack.c.l.b16 %v325
    %v586 = vunpack.c.l.b16 %v326
    %v587 = vunpack.c.l.b16 %v327
    %v588 = vunpack.c.l.b16 %v328
    %v589 = vunpack.c.l.b16 %v329
    %v590 = vunpack.c.l.b16 %v330
    %v591 = vunpack.c.l.b16 %v331
    %v592 = vunpack.c.l.b16 %v332
    %v593 = vunpack.c.l.b16 %v333
    %v594 = vunpack.c.l.b16 %v334
    %v595 = vunpack.c.l.b16 %v335
    %v596 = vunpack.c.l.b16 %v336
    %v597 = vunpack.c.l.b16 %v337
    %v598 = vunpack.c.l.b16 %v338
    %v599 = vunpack.c.l.b16 %v339
    %v600 = vunpack.c.l.b16 %v340
    %v601 = vunpack.c.l.b16 %v341
    %v602 = vunpack.c.l.b16 %v342
    %v603 = vunpack.c.l.b16 %v343
    %v604 = vunpack.c.l.b16 %v344
    %v605 = vunpack.c.l.b16 %v345
    %v606 = vunpack.c.l.b16 %v346
    %v607 = vunpack.c.l.b16 %v347
    %v608 = vunpack.c.l.b16 %v348
    %v609 = vunpack.c.l.b16 %v349
    %v610 = vunpack.c.l.b16 %v350
    %v611 = vunpack.c.l.b16 %v351
    %v612 = vunpack.c.l.b16 %v352
    %v613 = vunpack.c.l.b16 %v353
    %v614 = vunpack.c.l.b16 %v354
    %v615 = vunpack.c.l.b16 %v355
    %v616 = vunpack.c.l.b16 %v356
    %v617 = vunpack.c.l.b16 %v357
    %v618 = vunpack.c.l.b16 %v358
    %v619 = vunpack.c.l.b16 %v359
    %v620 = vunpack.c.l.b16 %v360
    %v621 = vunpack.c.l.b16 %v361
    %v622 = vunpack.c.l.b16 %v362
    %v623 = vunpack.c.l.b16 %v363
    %v624 = vunpack.c.l.b16 %v364
    %v625 = vunpack.c.l.b16 %v365
    %v626 = vunpack.c.l.b16 %v366
    %v627 = vunpack.c.l.b16 %v367
    %v628 = vunpack.c.l.b16 %v368
    %v629 = vunpack.c.l.b16 %v369
    %v630 = vunpack.c.l.b16 %v370
    %v631 = vunpack.c.l.b16 %v371
    %v632 = vunpack.c.l.b16 %v372
    %v633 = vunpack.c.l.b16 %v373
    %v634 = vunpack.c.l.b16 %v374
    %v635 = vunpack.c.l.b16 %v375
    %v636 = vunpack.c.l.b16 %v376
    %v637 = vunpack.c.l.b16 %v377
    %v638 = vunpack.c.l.b16 %v378
    %v639 = vunpack.c.l.b16 %v379
    %v640 = vunpack.c.l.b16 %v380
    %v641 = vunpack.c.l.b16 %v381
    %v642 = vunpack.c.l.b16 %v382
    %v643 = vunpack.c.l.b16 %v383
    %v644 = vunpack.c.l.b16 %v384
    %v645 = vunpack.c.l.b16 %v385
    %v646 = vunpack.c.l.b16 %v386
    %v647 = vunpack.c.l.b16 %v387
    %v648 = vunpack.c.l.b16 %v388
    %v649 = vunpack.c.l.b16 %v389
    %v650 = vunpack.c.l.b16 %v390
    %v651 = vunpack.c.l.b16 %v391
    %v652 = vunpack.c.l.b16 %v392
    %v653 = vunpack.c.l.b16 %v393
    %v654 = vunpack.c.l.b16 %v394
    %v655 = vunpack.c.l.b16 %v395
    %v656 = vunpack.c.l.b16 %v396
    %v657 = vunpack.c.l.b16 %v397
    %v658 = vunpack.c.l.b16 %v398
    %v659 = vunpack.c.l.b16 %v399
    %v660 = vunpack.c.l.b16 %v400
    %v661 = vunpack.c.l.b16 %v401
    %v662 = vunpack.c.l.b16 %v402
    %v663 = vunpack.c.l.b16 %v403
    %v664 = vunpack.c.l.b16 %v404
    %v665 = vunpack.c.l.b16 %v405
    %v666 = vunpack.c.l.b16 %v406
    %v667 = vunpack.c.l.b16 %v407
    %v668 = vunpack.c.l.b16 %v408
    %v669 = vunpack.c.l.b16 %v409
    %v670 = vunpack.c.l.b16 %v410
    %v671 = vunpack.c.l.b16 %v411
    %v672 = vunpack.c.l.b16 %v412
    %v673 = vunpack.c.l.b16 %v413
    %v674 = vunpack.c.l.b16 %v414
    %v675 = vunpack.c.l.b16 %v415
    %v676 = vunpack.c.l.b16 %v416
    %v677 = vunpack.c.l.b16 %v417
    %v678 = vunpack.c.l.b16 %v418
    %v679 = vunpack.c.l.b16 %v419
    %v680 = vunpack.c.l.b16 %v420
    %v681 = vunpack.c.l.b16 %v421
    %v682 = vunpack.c.l.b16 %v422
    %v683 = vunpack.c.l.b16 %v423
    %v684 = vunpack.c.l.b16 %v424
    %v685 = vunpack.c.l.b16 %v425
    %v686 = vunpack.c.l.b16 %v426
    %v687 = vunpack.c.l.b16 %v427
    %v688 = vunpack.c.l.b16 %v428
    %v689 = vunpack.c.l.b16 %v429
    %v690 = vunpack.c.l.b16 %v430
    %v691 = vunpack.c.l.b16 %v431
    %v692 = vunpack.c.l.b16 %v432
    %v693 = vunpack.c.l.b16 %v433
    %v694 = vunpack.c.l.b16 %v434
    %v695 = vunpack.c.l.b16 %v435
    %v696 = vunpack.c.l.b16 %v436
    %v697 = vunpack.c.l.b16 %v437
    %v698 = vunpack.c.l.b16 %v438
    %v699 = vunpack.c.l.b16 %v439
    %v700 = vunpack.c.l.b16 %v440
    %v701 = vpack.c.b16 %v574, %v573
    %v702 = vpack.c.b16 %v576, %v575
    %v703 = vpack.c.b16 %v578, %v577
    %v704 = vpack.c.b16 %v580, %v579
    %v705 = vpack.c.b16 %v582, %v581
    %v706 = vpack.c.b16 %v584, %v583
    %v707 = vpack.c.b16 %v586, %v585
    %v708 = vpack.c.b16 %v588, %v587
    %v709 = vpack.c.b16 %v590, %v589
    %v710 = vpack.c.b16 %v592, %v591
    %v711 = vpack.c.b16 %v594, %v593
    %v712 = vpack.c.b16 %v596, %v595
    %v713 = vpack.c.b16 %v598, %v597
    %v714 = vpack.c.b16 %v600, %v599
    %v715 = vpack.c.b16 %v602, %v601
    %v716 = vpack.c.b16 %v604, %v603
    %v717 = vpack.c.b16 %v606, %v605
    %v718 = vpack.c.b16 %v608, %v607
    %v719 = vpack.c.b16 %v610, %v609
    %v720 = vpack.c.b16 %v612, %v611
    %v721 = vpack.c.b16 %v614, %v613
    %v722 = vpack.c.b16 %v616, %v615
    %v723 = vpack.c.b16 %v618, %v617
    %v724 = vpack.c.b16 %v620, %v619
    %v725 = vpack.c.b16 %v622, %v621
    %v726 = vpack.c.b16 %v624, %v623
    %v727 = vpack.c.b16 %v626, %v625
    %v728 = vpack.c.b16 %v628, %v627
    %v729 = vpack.c.b16 %v630, %v629
    %v730 = vpack.c.b16 %v632, %v631
    %v731 = vpack.c.b16 %v634, %v633
    %v732 = vpack.c.b16 %v636, %v635
    %v733 = vpack.c.b16 %v638, %v637
    %v734 = vpack.c.b16 %v640, %v639
    %v735 = vpack.c.b16 %v642, %v641
    %v736 = vpack.c.b16 %v644, %v643
    %v737 = vpack.c.b16 %v646, %v645
    %v738 = vpack.c.b16 %v648, %v647
    %v739 = vpack.c.b16 %v650, %v649
    %v740 = vpack.c.b16 %v652, %v651
    %v741 = vpack.c.b16 %v654, %v653
    %v742 = vpack.c.b16 %v656, %v655
    %v743 = vpack.c.b16 %v658, %v657
    %v744 = vpack.c.b16 %v660, %v659
    %v745 = vpack.c.b16 %v662, %v661
    %v746 = vpack.c.b16 %v664, %v663
    %v747 = vpack.c.b16 %v666, %v665
    %v748 = vpack.c.b16 %v668, %v667
    %v749 = vpack.c.b16 %v670, %v669
    %v750 = vpack.c.b16 %v672, %v671
    %v751 = vpack.c.b16 %v674, %v673
    %v752 = vpack.c.b16 %v676, %v675
    %v753 = vpack.c.b16 %v678, %v677
    %v754 = vpack.c.b16 %v680, %v679
    %v755 = vpack.c.b16 %v682, %v681
    %v756 = vpack.c.b16 %v684, %v683
    %v757 = vpack.c.b16 %v686, %v685
    %v758 = vpack.c.b16 %v688, %v687
    %v759 = vpack.c.b16 %v690, %v689
    %v760 = vpack.c.b16 %v692, %v691
    %v761 = vpack.c.b16 %v694, %v693
    %v762 = vpack.c.b16 %v696, %v695
    %v763 = vpack.c.b16 %v698, %v697
    %v764 = vpack.c.b16 %v700, %v699
    %829 = vmatpush.bf16.msra.mxu0 %v708
    %830 = vmatpush.bf16.msra.mxu0 %v707
    %831 = vmatpush.bf16.msra.mxu0 %v706
    %832 = vmatpush.bf16.msra.mxu0 %v705
    %833 = vmatpush.bf16.msra.mxu0 %v704
    %834 = vmatpush.bf16.msra.mxu0 %v703
    %835 = vmatpush.bf16.msra.mxu0 %v702
    %836 = vmatpush.bf16.msra.mxu0 %v701
    %837 = vmatmul.bf16.gmra.mxu0 %v305
    %v838 = vpop.f32.mrf.mxu0
    %v839 = vadd.f32 %v443, %v838
    %v840 = vpop.f32.mrf.mxu0
    %841 = vdwg.mxu0
    %842 = vmatpush.bf16.msra.mxu0 %v716
    %843 = vmatpush.bf16.msra.mxu0 %v715
    %844 = vmatpush.bf16.msra.mxu0 %v714
    %845 = vmatpush.bf16.msra.mxu0 %v713
    %846 = vmatpush.bf16.msra.mxu0 %v712
    %847 = vmatpush.bf16.msra.mxu0 %v711
    %848 = vmatpush.bf16.msra.mxu0 %v710
    %849 = vmatpush.bf16.msra.mxu0 %v709
    %850 = vmatmul.bf16.gmra.mxu0 %v306
    %v851 = vpop.f32.mrf.mxu0
    %v852 = vadd.f32 %v839, %v851
    %v853 = vpop.f32.mrf.mxu0
    %854 = vdwg.mxu0
    %855 = vmatpush.bf16.msra.mxu0 %v724
    %856 = vmatpush.bf16.msra.mxu0 %v723
    %857 = vmatpush.bf16.msra.mxu0 %v722
    %858 = vmatpush.bf16.msra.mxu0 %v721
    %859 = vmatpush.bf16.msra.mxu0 %v720
    %860 = vmatpush.bf16.msra.mxu0 %v719
    %861 = vmatpush.bf16.msra.mxu0 %v718
    %862 = vmatpush.bf16.msra.mxu0 %v717
    %863 = vmatmul.bf16.gmra.mxu0 %v307
    %v864 = vpop.f32.mrf.mxu0
    %v865 = vadd.f32 %v852, %v864
    %v866 = vpop.f32.mrf.mxu0
    %867 = vdwg.mxu0
    %868 = vmatpush.bf16.msra.mxu0 %v732
    %869 = vmatpush.bf16.msra.mxu0 %v731
    %870 = vmatpush.bf16.msra.mxu0 %v730
    %871 = vmatpush.bf16.msra.mxu0 %v729
    %872 = vmatpush.bf16.msra.mxu0 %v728
    %873 = vmatpush.bf16.msra.mxu0 %v727
    %874 = vmatpush.bf16.msra.mxu0 %v726
    %875 = vmatpush.bf16.msra.mxu0 %v725
    %876 = vmatmul.bf16.gmra.mxu0 %v308
    %v877 = vpop.f32.mrf.mxu0
    %v878 = vadd.f32 %v865, %v877
    %v879 = vpop.f32.mrf.mxu0
    %880 = vdwg.mxu0
    %881 = vmatpush.bf16.msra.mxu0 %v740
    %882 = vmatpush.bf16.msra.mxu0 %v739
    %883 = vmatpush.bf16.msra.mxu0 %v738
    %884 = vmatpush.bf16.msra.mxu0 %v737
    %885 = vmatpush.bf16.msra.mxu0 %v736
    %886 = vmatpush.bf16.msra.mxu0 %v735
    %887 = vmatpush.bf16.msra.mxu0 %v734
    %888 = vmatpush.bf16.msra.mxu0 %v733
    %889 = vmatmul.bf16.gmra.mxu0 %v309
    %v890 = vpop.f32.mrf.mxu0
    %v891 = vadd.f32 %v878, %v890
    %v892 = vpop.f32.mrf.mxu0
    %893 = vdwg.mxu0
    %894 = vmatpush.bf16.msra.mxu0 %v748
    %895 = vmatpush.bf16.msra.mxu0 %v747
    %896 = vmatpush.bf16.msra.mxu0 %v746
    %897 = vmatpush.bf16.msra.mxu0 %v745
    %898 = vmatpush.bf16.msra.mxu0 %v744
    %899 = vmatpush.bf16.msra.mxu0 %v743
    %900 = vmatpush.bf16.msra.mxu0 %v742
    %901 = vmatpush.bf16.msra.mxu0 %v741
    %902 = vmatmul.bf16.gmra.mxu0 %v310
    %v903 = vpop.f32.mrf.mxu0
    %v904 = vadd.f32 %v891, %v903
    %v905 = vpop.f32.mrf.mxu0
    %906 = vdwg.mxu0
    %907 = vmatpush.bf16.msra.mxu0 %v756
    %908 = vmatpush.bf16.msra.mxu0 %v755
    %909 = vmatpush.bf16.msra.mxu0 %v754
    %910 = vmatpush.bf16.msra.mxu0 %v753
    %911 = vmatpush.bf16.msra.mxu0 %v752
    %912 = vmatpush.bf16.msra.mxu0 %v751
    %913 = vmatpush.bf16.msra.mxu0 %v750
    %914 = vmatpush.bf16.msra.mxu0 %v749
    %915 = vmatmul.bf16.gmra.mxu0 %v311
    %v916 = vpop.f32.mrf.mxu0
    %v917 = vadd.f32 %v904, %v916
    %v918 = vpop.f32.mrf.mxu0
    %919 = vdwg.mxu0
    %920 = vmatpush.bf16.msra.mxu0 %v764
    %921 = vmatpush.bf16.msra.mxu0 %v763
    %922 = vmatpush.bf16.msra.mxu0 %v762
    %923 = vmatpush.bf16.msra.mxu0 %v761
    %924 = vmatpush.bf16.msra.mxu0 %v760
    %925 = vmatpush.bf16.msra.mxu0 %v759
    %926 = vmatpush.bf16.msra.mxu0 %v758
    %927 = vmatpush.bf16.msra.mxu0 %v757
    %928 = vmatmul.bf16.gmra.mxu0 %v312
    %v929 = vpop.f32.mrf.mxu0
    %v930 = vadd.f32 %v917, %v929
    %v931 = vpop.f32.mrf.mxu0
    %932 = vdwg.mxu0
    %v933 = vpack.c.bf16 %v930, %v930
    %v934 = vld [vmem:[#allocation6] sm:$0xf]
    %v935 = vld [vmem:[#allocation6 + $0x4] sm:$0xf]
    %v936 = vld [vmem:[#allocation6 + $0x8] sm:$0xf]
    %v937 = vld [vmem:[#allocation6 + $0xc] sm:$0xf]
    %v938 = vld [vmem:[#allocation6 + $0x10] sm:$0xf]
    %v939 = vld [vmem:[#allocation6 + $0x14] sm:$0xf]
    %v940 = vld [vmem:[#allocation6 + $0x18] sm:$0xf]
    %v941 = vld [vmem:[#allocation6 + $0x1c] sm:$0xf]
    %v942 = vld [vmem:[#allocation6 + $0x20] sm:$0xf]
    %v943 = vld [vmem:[#allocation6 + $0x24] sm:$0xf]
    %v944 = vld [vmem:[#allocation6 + $0x28] sm:$0xf]
    %v945 = vld [vmem:[#allocation6 + $0x2c] sm:$0xf]
    %v946 = vld [vmem:[#allocation6 + $0x30] sm:$0xf]
    %v947 = vld [vmem:[#allocation6 + $0x34] sm:$0xf]
    %v948 = vld [vmem:[#allocation6 + $0x38] sm:$0xf]
    %v949 = vld [vmem:[#allocation6 + $0x3c] sm:$0xf]
    %v950 = vld [vmem:[%s6] sm:$0x1]
    %v952 = vperm.slane %v950, 0
    %v970 = vunpack.c.l.b16 %v934
    %v971 = vunpack.c.l.b16 %v935
    %v972 = vunpack.c.l.b16 %v936
    %v973 = vunpack.c.l.b16 %v937
    %v974 = vunpack.c.l.b16 %v938
    %v975 = vunpack.c.l.b16 %v939
    %v976 = vunpack.c.l.b16 %v940
    %v977 = vunpack.c.l.b16 %v941
    %v978 = vunpack.c.l.b16 %v942
    %v979 = vunpack.c.l.b16 %v943
    %v980 = vunpack.c.l.b16 %v944
    %v981 = vunpack.c.l.b16 %v945
    %v982 = vunpack.c.l.b16 %v946
    %v983 = vunpack.c.l.b16 %v947
    %v984 = vunpack.c.l.b16 %v948
    %v985 = vunpack.c.l.b16 %v949
    %v986 = vpack.c.b16 %v971, %v970
    %v987 = vpack.c.b16 %v973, %v972
    %v988 = vpack.c.b16 %v975, %v974
    %v989 = vpack.c.b16 %v977, %v976
    %v990 = vpack.c.b16 %v979, %v978
    %v991 = vpack.c.b16 %v981, %v980
    %v992 = vpack.c.b16 %v983, %v982
    %v993 = vpack.c.b16 %v985, %v984
    %1002 = vmatpush.bf16.msra.mxu0 %v993
    %1003 = vmatpush.bf16.msra.mxu0 %v992
    %1004 = vmatpush.bf16.msra.mxu0 %v991
    %1005 = vmatpush.bf16.msra.mxu0 %v990
    %1006 = vmatpush.bf16.msra.mxu0 %v989
    %1007 = vmatpush.bf16.msra.mxu0 %v988
    %1008 = vmatpush.bf16.msra.mxu0 %v987
    %1009 = vmatpush.bf16.msra.mxu0 %v986
    %1010 = vmatmul.bf16.gmra.mxu0 %v933
    %v1011 = vpop.f32.mrf.mxu0
    %v1012 = vadd.f32 %v952, %v1011
    %v1013 = vpop.f32.mrf.mxu0
    %1014 = vdwg.mxu0
    %v1015 = vpack.c.bf16 %v1012, %v1012
    %1016 = vst [vmem:[%s7] sm:$0xf] %v1015
    // Predicated region
    $region42: #{embedding_model_forward.1} parent=1 // pred_check
      _
    $region43: #{embedding_model_forward.1} parent=1 // pred_check_branch
      %1018 = sbr.rel (0) target = $region45
    $region44: #{embedding_model_forward.1} parent=1 // pred_region
      _
    $region45: #{embedding_model_forward.1} parent=1 // pred_fallthru
      _
    // Predicated region
    $region46: #{embedding_model_forward.1} parent=1 // pred_check
      _
    $region47: #{embedding_model_forward.1} parent=1 // pred_check_branch
      %1020 = sbr.rel (0) target = $region49
    $region48: #{embedding_model_forward.1} parent=1 // pred_region
      _
    $region49: #{embedding_model_forward.1} parent=1 // pred_fallthru
      _
    %1021 = vsyncpa [#allocation3], 1
    %1022 = vsyncpa [#allocation5], 1

</llo_original>
